<compile_context>
chip_gen: v5e
topology: v5e:2x2
jax: 0.10.0
libtpu: 0.0.40
codegen_flags: <defaults>
</compile_context>

<pallas_src>
import functools

import jax
import jax.numpy as jnp
from jax.experimental import pallas as pl
from jax.experimental.pallas import tpu as pltpu


def classifier_kernel(patches_ref, wT_ref, b_ref, pool_ref, fcwT_ref, fcbT_ref,
                      o_ref):
    """Single grid step over the whole batch.

    patches_ref : (9*C, N*H*W)  im2col patch slab, spatial on the lane axis
    wT_ref      : (F, 9*C)      conv weights, im2col-packed and transposed
    b_ref       : (F, 1)        conv bias (broadcast over lanes)
    pool_ref    : (N*H*W, N)    block-mean matrix (1/(H*W) folded in)
    fcwT_ref    : (K, F)        linear weights, transposed
    fcbT_ref    : (K, 1)        linear bias
    o_ref       : (K, N)        transposed logits (wrapper transposes back)
    """
    # Conv as one lane-dense MXU matmul: (F, 9C) @ (9C, N*H*W) -> (F, N*H*W).
    acc = jnp.dot(wT_ref[...], patches_ref[...],
                  preferred_element_type=jnp.float32)
    acc = jnp.maximum(acc + b_ref[...], 0.0)           # bias + ReLU, lane-dense

    # Global average pool per batch sample as a tiny matmul (MXU is idle
    # anyway); the 1/(H*W) scale lives in pool_ref.
    pooled = jnp.dot(acc, pool_ref[...],
                     preferred_element_type=jnp.float32)        # (F, N)

    # FC in the transposed domain -> plain (non-transposed) dot only.
    logits_t = jnp.dot(fcwT_ref[...], pooled,
                       preferred_element_type=jnp.float32)      # (K, N)
    o_ref[...] = (logits_t + fcbT_ref[...]).astype(o_ref.dtype)


@functools.partial(jax.jit, static_argnames=())
def classifier_forward(x_nchw, conv_w, conv_b, fc_w, fc_b):
    """x_nchw: (N, C, H, W) float32 -> logits (N, K)."""
    N, C, H, W = x_nchw.shape
    F = conv_w.shape[-1]
    K = fc_w.shape[-1]
    HW = H * W

    # ---- trace-time glue (tiny, done once by XLA outside the kernel) -------
    # NCHW -> NHWC, SAME zero-padding.
    x_nhwc = jnp.transpose(x_nchw, (0, 2, 3, 1)).astype(jnp.float32)
    xp = jnp.pad(x_nhwc, ((0, 0), (1, 1), (1, 1), (0, 0)))

    # im2col, transposed so the big N*H*W axis lands on the TPU lane axis.
    # Row order is (dy, dx, c), matching the HWIO weight reshape below.
    taps = jnp.stack([xp[:, dy:dy + H, dx:dx + W, :]
                      for dy in range(3) for dx in range(3)], axis=0)
    patches_t = jnp.transpose(taps, (0, 4, 1, 2, 3)).reshape(9 * C, N * HW)

    # Conv weights as a transposed im2col slab (F, 9*C).
    w_t = jnp.transpose(conv_w.reshape(9 * C, F)).astype(jnp.float32)

    # Block-mean pooling matrix (N*HW, N) with the 1/(H*W) scale folded in.
    pool = jnp.repeat(jnp.eye(N, dtype=jnp.float32), HW, axis=0) * (1.0 / HW)

    fcw_t = jnp.transpose(fc_w).astype(jnp.float32)             # (K, F)

    # ---- single-step Pallas call: everything resident in VMEM, one fetch ---
    vmem = pl.BlockSpec(memory_space=pltpu.MemorySpace.VMEM)
    logits_t = pl.pallas_call(
        classifier_kernel,
        out_shape=jax.ShapeDtypeStruct((K, N), jnp.float32),
        in_specs=[vmem, vmem, vmem, vmem, vmem, vmem],
        out_specs=vmem,
    )(patches_t, w_t, conv_b.reshape(F, 1).astype(jnp.float32), pool,
      fcw_t, fc_b.reshape(K, 1).astype(jnp.float32))

    return logits_t.T                                           # (N, K)


class ModelPallas:
    """Mirrors the dispatch semantics of the PyTorch `Model` (Classify_only)."""

    def __init__(self, key, in_channels=4, features=8, num_classes=2):
        k1, k2, k3, k4 = jax.random.split(key, 4)
        # Deterministic synthetic parameters (HWIO conv layout).
        self.conv_w = 0.1 * jax.random.normal(
            k1, (3, 3, in_channels, features), jnp.float32)
        self.conv_b = 0.1 * jax.random.normal(k2, (features,), jnp.float32)
        self.fc_w = 0.1 * jax.random.normal(
            k3, (features, num_classes), jnp.float32)
        self.fc_b = 0.1 * jax.random.normal(k4, (num_classes,), jnp.float32)

    def __call__(self, x, itype):
        if itype == 'classifier':
            return classifier_forward(x, self.conv_w, self.conv_b,
                                      self.fc_w, self.fc_b)
        # TODO(synk): 'encoder' / 'decoder' / 'decoder_inf' are never built in
        # the given source (Classify_only), so there is nothing to translate.
        raise NotImplementedError(f"itype={itype!r} not built in this model")


def _reference(x_nchw, conv_w, conv_b, fc_w, fc_b):
    """Plain-JAX reference of the same classifier (for validation)."""
    x = jnp.transpose(x_nchw, (0, 2, 3, 1)).astype(jnp.float32)
    y = jax.lax.conv_general_dilated(
        x, conv_w, window_strides=(1, 1), padding='SAME',
        dimension_numbers=('NHWC', 'HWIO', 'NHWC'))
    y = jnp.maximum(y + conv_b, 0.0)
    p = jnp.mean(y, axis=(1, 2))
    return p @ fc_w + fc_b


if __name__ == "__main__":
    key = jax.random.PRNGKey(0)
    k_in, k_model = jax.random.split(key)

    # Small deterministic NCHW input (batch=2, channels=4, spatial=16x16).
    x = jax.random.normal(k_in, (2, 4, 16, 16), jnp.float32)

    model = ModelPallas(k_model, in_channels=4, features=8, num_classes=2)

    out = model(x, 'classifier')
    out = jax.block_until_ready(out)

    ref = _reference(x, model.conv_w, model.conv_b, model.fc_w, model.fc_b)
    assert out.shape == ref.shape == (2, 2)
    assert jnp.allclose(out, ref, atol=1e-4, rtol=1e-4), (out, ref)

    print("KERNEL_OK")
</pallas_src>

<mosaic_0001>
module attributes {stable_mosaic.version = 11 : i64} {
  func.func @classifier_kernel(%arg0: memref<36x512xf32, #tpu.memory_space<vmem>>, %arg1: memref<8x36xf32, #tpu.memory_space<vmem>>, %arg2: memref<8x1xf32, #tpu.memory_space<vmem>>, %arg3: memref<512x2xf32, #tpu.memory_space<vmem>>, %arg4: memref<2x8xf32, #tpu.memory_space<vmem>>, %arg5: memref<2x1xf32, #tpu.memory_space<vmem>>, %arg6: memref<2x2xf32, #tpu.memory_space<vmem>>) attributes {dimension_semantics = [], scalar_prefetch = 0 : i64, scratch_operands = 0 : i64, tpu.core_type = #tpu.core_type<tc>} {
    %c0 = arith.constant 0 : index
    %c0_0 = arith.constant 0 : index
    %0 = vector.load %arg1[%c0, %c0_0] : memref<8x36xf32, #tpu.memory_space<vmem>>, vector<8x36xf32>
    %c0_1 = arith.constant 0 : index
    %c0_2 = arith.constant 0 : index
    %1 = vector.load %arg0[%c0_1, %c0_2] : memref<36x512xf32, #tpu.memory_space<vmem>>, vector<36x512xf32>
    %cst = arith.constant dense<0.000000e+00> : vector<8x512xf32>
    %2 = tpu.matmul %0, %1, %cst {dimension_numbers = #tpu.dot_dimension_numbers<[1], [0], [0], [1], [0, 0, 1, 1], [], []>} : vector<8x36xf32>, vector<36x512xf32>, vector<8x512xf32> -> vector<8x512xf32>
    %c0_3 = arith.constant 0 : index
    %c0_4 = arith.constant 0 : index
    %3 = vector.load %arg2[%c0_3, %c0_4] : memref<8x1xf32, #tpu.memory_space<vmem>>, vector<8x1xf32>
    %4 = vector.broadcast %3 : vector<8x1xf32> to vector<8x512xf32>
    %5 = arith.addf %2, %4 : vector<8x512xf32>
    %cst_5 = arith.constant 0.000000e+00 : f32
    %6 = vector.broadcast %cst_5 : f32 to vector<8x512xf32>
    %7 = arith.maximumf %5, %6 : vector<8x512xf32>
    %c0_6 = arith.constant 0 : index
    %c0_7 = arith.constant 0 : index
    %8 = vector.load %arg3[%c0_6, %c0_7] : memref<512x2xf32, #tpu.memory_space<vmem>>, vector<512x2xf32>
    %cst_8 = arith.constant dense<0.000000e+00> : vector<8x2xf32>
    %9 = tpu.matmul %7, %8, %cst_8 {dimension_numbers = #tpu.dot_dimension_numbers<[1], [0], [0], [1], [0, 0, 1, 1], [], []>} : vector<8x512xf32>, vector<512x2xf32>, vector<8x2xf32> -> vector<8x2xf32>
    %c0_9 = arith.constant 0 : index
    %c0_10 = arith.constant 0 : index
    %10 = vector.load %arg4[%c0_9, %c0_10] : memref<2x8xf32, #tpu.memory_space<vmem>>, vector<2x8xf32>
    %cst_11 = arith.constant dense<0.000000e+00> : vector<2x2xf32>
    %11 = tpu.matmul %10, %9, %cst_11 {dimension_numbers = #tpu.dot_dimension_numbers<[1], [0], [0], [1], [0, 0, 1, 1], [], []>} : vector<2x8xf32>, vector<8x2xf32>, vector<2x2xf32> -> vector<2x2xf32>
    %c0_12 = arith.constant 0 : index
    %c0_13 = arith.constant 0 : index
    %12 = vector.load %arg5[%c0_12, %c0_13] : memref<2x1xf32, #tpu.memory_space<vmem>>, vector<2x1xf32>
    %13 = vector.broadcast %12 : vector<2x1xf32> to vector<2x2xf32>
    %14 = arith.addf %11, %13 : vector<2x2xf32>
    %c0_14 = arith.constant 0 : index
    %c0_15 = arith.constant 0 : index
    %15 = vector.load %arg6[%c0_14, %c0_15] : memref<2x2xf32, #tpu.memory_space<vmem>>, vector<2x2xf32>
    tpu.vector_store %arg6[%c0_14, %c0_15], %14 {strides = array<i32>} : memref<2x2xf32, #tpu.memory_space<vmem>>, vector<2x2xf32>,
    return
  }
}

</mosaic_0001>

<llo_original>
// kernel: classifier_forward.1
$region0: #{classifier_forward.1}
  #allocation0 [shape = 'u32[]', space=smem, size = 0x4, offset = 0x4, fixed_abs, tag = 'smem constant byte address 0x4 - core index']
  #allocation1 [shape = 'u32[72,128]{1,0:T(1,128)}', space=vmem, size = 0x9000, scoped, tag = 'internal scratch']
  %s0 = inlined_call_operand.vmem [shape: f32[36,512], index: 0, kind: input, shape index: {}]
  %s1 = inlined_call_operand.vmem [shape: f32[8,36], index: 1, kind: input, shape index: {}]
  %s2 = inlined_call_operand.vmem [shape: f32[8,1], index: 2, kind: input, shape index: {}]
  %s3 = inlined_call_operand.vmem [shape: f32[512,2], index: 3, kind: input, shape index: {}]
  %s4 = inlined_call_operand.vmem [shape: f32[2,8], index: 4, kind: input, shape index: {}]
  %s5 = inlined_call_operand.vmem [shape: f32[2,1], index: 5, kind: input, shape index: {}]
  %s6 = inlined_call_operand.vmem [shape: f32[2,2], index: 6, kind: output, shape index: {}]
  %s7 = sld [smem:[#allocation0]]
  $region34: #{classifier_forward.1} parent=0
    _
  %s9 = ssub.s32 1, %s7
  %s10 = scalar_select 0, %s9, %s7
  // Predicated region
  $region2: #{classifier_forward.1} parent=0 // pred_check
    _
  $region3: #{classifier_forward.1} parent=0 // pred_check_branch
    %12 = sbr.rel (0) target = $region5
  $region4: #{classifier_forward.1} parent=0 // pred_region
    _
  $region5: #{classifier_forward.1} parent=0 // pred_fallthru
    _
  // Predicated region
  $region6: #{classifier_forward.1} parent=0 // pred_check
    _
  $region7: #{classifier_forward.1} parent=0 // pred_check_branch
    %14 = sbr.rel (0) target = $region9
  $region8: #{classifier_forward.1} parent=0 // pred_region
    _
  $region9: #{classifier_forward.1} parent=0 // pred_fallthru
    _
  // Predicated region
  $region10: #{classifier_forward.1} parent=0 // pred_check
    _
  $region11: #{classifier_forward.1} parent=0 // pred_check_branch
    %16 = sbr.rel (0) target = $region13
  $region12: #{classifier_forward.1} parent=0 // pred_region
    _
  $region13: #{classifier_forward.1} parent=0 // pred_fallthru
    _
  // Predicated region
  $region14: #{classifier_forward.1} parent=0 // pred_check
    _
  $region15: #{classifier_forward.1} parent=0 // pred_check_branch
    %18 = sbr.rel (0) target = $region17
  $region16: #{classifier_forward.1} parent=0 // pred_region
    _
  $region17: #{classifier_forward.1} parent=0 // pred_fallthru
    _
  // Predicated region
  $region18: #{classifier_forward.1} parent=0 // pred_check
    _
  $region19: #{classifier_forward.1} parent=0 // pred_check_branch
    %20 = sbr.rel (0) target = $region21
  $region20: #{classifier_forward.1} parent=0 // pred_region
    _
  $region21: #{classifier_forward.1} parent=0 // pred_fallthru
    _
  // Predicated region
  $region22: #{classifier_forward.1} parent=0 // pred_check
    _
  $region23: #{classifier_forward.1} parent=0 // pred_check_branch
    %22 = sbr.rel (0) target = $region25
  $region24: #{classifier_forward.1} parent=0 // pred_region
    _
  $region25: #{classifier_forward.1} parent=0 // pred_fallthru
    _
  %v23 = vld [vmem:[%s1] sm:$0xff]
  %v24 = vld [vmem:[%s0] sm:$0xff]
  %v25 = vld [vmem:[%s0 + $0x8] sm:$0xff]
  %v26 = vld [vmem:[%s0 + $0x10] sm:$0xff]
  %v27 = vld [vmem:[%s0 + $0x18] sm:$0xff]
  %v28 = vld [vmem:[%s0 + $0x20] sm:$0xff]
  %v29 = vld [vmem:[%s0 + $0x28] sm:$0xff]
  %v30 = vld [vmem:[%s0 + $0x30] sm:$0xff]
  %v31 = vld [vmem:[%s0 + $0x38] sm:$0xff]
  %v32 = vld [vmem:[%s0 + $0x40] sm:$0xff]
  %v33 = vld [vmem:[%s0 + $0x48] sm:$0xff]
  %v34 = vld [vmem:[%s0 + $0x50] sm:$0xff]
  %v35 = vld [vmem:[%s0 + $0x58] sm:$0xff]
  %v36 = vld [vmem:[%s0 + $0x60] sm:$0xff]
  %v37 = vld [vmem:[%s0 + $0x68] sm:$0xff]
  %v38 = vld [vmem:[%s0 + $0x70] sm:$0xff]
  %v39 = vld [vmem:[%s0 + $0x78] sm:$0xff]
  %v40 = vld [vmem:[%s0 + $0x80] sm:$0xf]
  %v41 = vld [vmem:[%s0 + $0x88] sm:$0xf]
  %v42 = vld [vmem:[%s0 + $0x90] sm:$0xf]
  %v43 = vld [vmem:[%s0 + $0x98] sm:$0xf]
  %v44 = vld [vmem:[%s2] sm:$0xff]
  %46 = vset.pattern.permute.xlu0 0
  %47 = vperm.xlu0 %46, %v44
  %v48 = vpop.permute.xlu0 %47
  %vm50 = vcmask 293888
  %v52 = vsel %vm50, %v23, 0
  %vm54 = vcmask 1043456
  %v56 = vsel %vm54, %v40, 0
  %v59 = vsel %vm54, %v41, 0
  %v62 = vsel %vm54, %v42, 0
  %v65 = vsel %vm54, %v43, 0
  %67 = vmatpush.msra.mxu0 0.0
  %68 = vmatpush.msra.mxu0 0.0
  %69 = vmatpush.msra.mxu0 0.0
  %70 = vmatpush.msra.mxu0 0.0
  %71 = vmatpush.msra.mxu0 0.0
  %72 = vmatpush.msra.mxu0 0.0
  %73 = vmatpush.msra.mxu0 0.0
  %74 = vmatpush.msra.mxu0 0.0
  %75 = vmatpush.msra.mxu0 0.0
  %76 = vmatpush.msra.mxu0 0.0
  %77 = vmatpush.msra.mxu0 0.0
  %78 = vmatpush.msra.mxu0 %v56
  %79 = vmatpush.msra.mxu0 %v36
  %80 = vmatpush.msra.mxu0 %v32
  %81 = vmatpush.msra.mxu0 %v28
  %82 = vmatpush.msra.mxu0 %v24
  %83 = vmatmul.f32.gmra.mxu0 %v52
  %v84 = vpop.f32.mrf.mxu0
  %v85 = vadd.f32 %v48, %v84
  %86 = vdwg.mxu0
  %87 = vmatpush.msra.mxu0 0.0
  %88 = vmatpush.msra.mxu0 0.0
  %89 = vmatpush.msra.mxu0 0.0
  %90 = vmatpush.msra.mxu0 0.0
  %91 = vmatpush.msra.mxu0 0.0
  %92 = vmatpush.msra.mxu0 0.0
  %93 = vmatpush.msra.mxu0 0.0
  %94 = vmatpush.msra.mxu0 0.0
  %95 = vmatpush.msra.mxu0 0.0
  %96 = vmatpush.msra.mxu0 0.0
  %97 = vmatpush.msra.mxu0 0.0
  %98 = vmatpush.msra.mxu0 %v59
  %99 = vmatpush.msra.mxu0 %v37
  %100 = vmatpush.msra.mxu0 %v33
  %101 = vmatpush.msra.mxu0 %v29
  %102 = vmatpush.msra.mxu0 %v25
  %103 = vmatmul.f32.gmra.mxu0 %v52
  %v104 = vpop.f32.mrf.mxu0
  %v105 = vadd.f32 %v48, %v104
  %106 = vdwg.mxu0
  %107 = vmatpush.msra.mxu0 0.0
  %108 = vmatpush.msra.mxu0 0.0
  %109 = vmatpush.msra.mxu0 0.0
  %110 = vmatpush.msra.mxu0 0.0
  %111 = vmatpush.msra.mxu0 0.0
  %112 = vmatpush.msra.mxu0 0.0
  %113 = vmatpush.msra.mxu0 0.0
  %114 = vmatpush.msra.mxu0 0.0
  %115 = vmatpush.msra.mxu0 0.0
  %116 = vmatpush.msra.mxu0 0.0
  %117 = vmatpush.msra.mxu0 0.0
  %118 = vmatpush.msra.mxu0 %v62
  %119 = vmatpush.msra.mxu0 %v38
  %120 = vmatpush.msra.mxu0 %v34
  %121 = vmatpush.msra.mxu0 %v30
  %122 = vmatpush.msra.mxu0 %v26
  %123 = vmatmul.f32.gmra.mxu0 %v52
  %v124 = vpop.f32.mrf.mxu0
  %v125 = vadd.f32 %v48, %v124
  %126 = vdwg.mxu0
  %127 = vmatpush.msra.mxu0 0.0
  %128 = vmatpush.msra.mxu0 0.0
  %129 = vmatpush.msra.mxu0 0.0
  %130 = vmatpush.msra.mxu0 0.0
  %131 = vmatpush.msra.mxu0 0.0
  %132 = vmatpush.msra.mxu0 0.0
  %133 = vmatpush.msra.mxu0 0.0
  %134 = vmatpush.msra.mxu0 0.0
  %135 = vmatpush.msra.mxu0 0.0
  %136 = vmatpush.msra.mxu0 0.0
  %137 = vmatpush.msra.mxu0 0.0
  %138 = vmatpush.msra.mxu0 %v65
  %139 = vmatpush.msra.mxu0 %v39
  %140 = vmatpush.msra.mxu0 %v35
  %141 = vmatpush.msra.mxu0 %v31
  %142 = vmatpush.msra.mxu0 %v27
  %143 = vmatmul.f32.gmra.mxu0 %v52
  %v144 = vpop.f32.mrf.mxu0
  %v145 = vadd.f32 %v48, %v144
  %146 = vdwg.mxu0
  %v147 = vmax.f32 %v85, 0.0
  %v148 = vmax.f32 %v105, 0.0
  %v149 = vmax.f32 %v125, 0.0
  %v150 = vmax.f32 %v145, 0.0
  %v151 = vld [vmem:[%s3] sm:$0xff]
  %v152 = vld [vmem:[%s3 + $0x8] sm:$0xff]
  %v153 = vld [vmem:[%s3 + $0x10] sm:$0xff]
  %v154 = vld [vmem:[%s3 + $0x18] sm:$0xff]
  %v155 = vld [vmem:[%s3 + $0x20] sm:$0xff]
  %v156 = vld [vmem:[%s3 + $0x28] sm:$0xff]
  %v157 = vld [vmem:[%s3 + $0x30] sm:$0xff]
  %v158 = vld [vmem:[%s3 + $0x38] sm:$0xff]
  %v159 = vld [vmem:[%s3 + $0x40] sm:$0xff]
  %v160 = vld [vmem:[%s3 + $0x48] sm:$0xff]
  %v161 = vld [vmem:[%s3 + $0x50] sm:$0xff]
  %v162 = vld [vmem:[%s3 + $0x58] sm:$0xff]
  %v163 = vld [vmem:[%s3 + $0x60] sm:$0xff]
  %v164 = vld [vmem:[%s3 + $0x68] sm:$0xff]
  %v165 = vld [vmem:[%s3 + $0x70] sm:$0xff]
  %v166 = vld [vmem:[%s3 + $0x78] sm:$0xff]
  %v167 = vld [vmem:[%s3 + $0x80] sm:$0xff]
  %v168 = vld [vmem:[%s3 + $0x88] sm:$0xff]
  %v169 = vld [vmem:[%s3 + $0x90] sm:$0xff]
  %v170 = vld [vmem:[%s3 + $0x98] sm:$0xff]
  %v171 = vld [vmem:[%s3 + $0xa0] sm:$0xff]
  %v172 = vld [vmem:[%s3 + $0xa8] sm:$0xff]
  %v173 = vld [vmem:[%s3 + $0xb0] sm:$0xff]
  %v174 = vld [vmem:[%s3 + $0xb8] sm:$0xff]
  %v175 = vld [vmem:[%s3 + $0xc0] sm:$0xff]
  %v176 = vld [vmem:[%s3 + $0xc8] sm:$0xff]
  %v177 = vld [vmem:[%s3 + $0xd0] sm:$0xff]
  %v178 = vld [vmem:[%s3 + $0xd8] sm:$0xff]
  %v179 = vld [vmem:[%s3 + $0xe0] sm:$0xff]
  %v180 = vld [vmem:[%s3 + $0xe8] sm:$0xff]
  %v181 = vld [vmem:[%s3 + $0xf0] sm:$0xff]
  %v182 = vld [vmem:[%s3 + $0xf8] sm:$0xff]
  %v183 = vld [vmem:[%s3 + $0x100] sm:$0xff]
  %v184 = vld [vmem:[%s3 + $0x108] sm:$0xff]
  %v185 = vld [vmem:[%s3 + $0x110] sm:$0xff]
  %v186 = vld [vmem:[%s3 + $0x118] sm:$0xff]
  %v187 = vld [vmem:[%s3 + $0x120] sm:$0xff]
  %v188 = vld [vmem:[%s3 + $0x128] sm:$0xff]
  %v189 = vld [vmem:[%s3 + $0x130] sm:$0xff]
  %v190 = vld [vmem:[%s3 + $0x138] sm:$0xff]
  %v191 = vld [vmem:[%s3 + $0x140] sm:$0xff]
  %v192 = vld [vmem:[%s3 + $0x148] sm:$0xff]
  %v193 = vld [vmem:[%s3 + $0x150] sm:$0xff]
  %v194 = vld [vmem:[%s3 + $0x158] sm:$0xff]
  %v195 = vld [vmem:[%s3 + $0x160] sm:$0xff]
  %v196 = vld [vmem:[%s3 + $0x168] sm:$0xff]
  %v197 = vld [vmem:[%s3 + $0x170] sm:$0xff]
  %v198 = vld [vmem:[%s3 + $0x178] sm:$0xff]
  %v199 = vld [vmem:[%s3 + $0x180] sm:$0xff]
  %v200 = vld [vmem:[%s3 + $0x188] sm:$0xff]
  %v201 = vld [vmem:[%s3 + $0x190] sm:$0xff]
  %v202 = vld [vmem:[%s3 + $0x198] sm:$0xff]
  %v203 = vld [vmem:[%s3 + $0x1a0] sm:$0xff]
  %v204 = vld [vmem:[%s3 + $0x1a8] sm:$0xff]
  %v205 = vld [vmem:[%s3 + $0x1b0] sm:$0xff]
  %v206 = vld [vmem:[%s3 + $0x1b8] sm:$0xff]
  %v207 = vld [vmem:[%s3 + $0x1c0] sm:$0xff]
  %v208 = vld [vmem:[%s3 + $0x1c8] sm:$0xff]
  %v209 = vld [vmem:[%s3 + $0x1d0] sm:$0xff]
  %v210 = vld [vmem:[%s3 + $0x1d8] sm:$0xff]
  %v211 = vld [vmem:[%s3 + $0x1e0] sm:$0xff]
  %v212 = vld [vmem:[%s3 + $0x1e8] sm:$0xff]
  %v213 = vld [vmem:[%s3 + $0x1f0] sm:$0xff]
  %v214 = vld [vmem:[%s3 + $0x1f8] sm:$0xff]
  %215 = vmatpush.msra.mxu0 %v166
  %216 = vmatpush.msra.mxu0 %v165
  %217 = vmatpush.msra.mxu0 %v164
  %218 = vmatpush.msra.mxu0 %v163
  %219 = vmatpush.msra.mxu0 %v162
  %220 = vmatpush.msra.mxu0 %v161
  %221 = vmatpush.msra.mxu0 %v160
  %222 = vmatpush.msra.mxu0 %v159
  %223 = vmatpush.msra.mxu0 %v158
  %224 = vmatpush.msra.mxu0 %v157
  %225 = vmatpush.msra.mxu0 %v156
  %226 = vmatpush.msra.mxu0 %v155
  %227 = vmatpush.msra.mxu0 %v154
  %228 = vmatpush.msra.mxu0 %v153
  %229 = vmatpush.msra.mxu0 %v152
  %230 = vmatpush.msra.mxu0 %v151
  %231 = vmatmul.f32.gmra.mxu0 %v147
  %v232 = vpop.f32.mrf.mxu0
  %v233 = vadd.f32 0.0, %v232
  %234 = vdwg.mxu0
  %235 = vmatpush.msra.mxu0 %v182
  %236 = vmatpush.msra.mxu0 %v181
  %237 = vmatpush.msra.mxu0 %v180
  %238 = vmatpush.msra.mxu0 %v179
  %239 = vmatpush.msra.mxu0 %v178
  %240 = vmatpush.msra.mxu0 %v177
  %241 = vmatpush.msra.mxu0 %v176
  %242 = vmatpush.msra.mxu0 %v175
  %243 = vmatpush.msra.mxu0 %v174
  %244 = vmatpush.msra.mxu0 %v173
  %245 = vmatpush.msra.mxu0 %v172
  %246 = vmatpush.msra.mxu0 %v171
  %247 = vmatpush.msra.mxu0 %v170
  %248 = vmatpush.msra.mxu0 %v169
  %249 = vmatpush.msra.mxu0 %v168
  %250 = vmatpush.msra.mxu0 %v167
  %251 = vmatmul.f32.gmra.mxu0 %v148
  %v252 = vpop.f32.mrf.mxu0
  %v253 = vadd.f32 %v233, %v252
  %254 = vdwg.mxu0
  %255 = vmatpush.msra.mxu0 %v198
  %256 = vmatpush.msra.mxu0 %v197
  %257 = vmatpush.msra.mxu0 %v196
  %258 = vmatpush.msra.mxu0 %v195
  %259 = vmatpush.msra.mxu0 %v194
  %260 = vmatpush.msra.mxu0 %v193
  %261 = vmatpush.msra.mxu0 %v192
  %262 = vmatpush.msra.mxu0 %v191
  %263 = vmatpush.msra.mxu0 %v190
  %264 = vmatpush.msra.mxu0 %v189
  %265 = vmatpush.msra.mxu0 %v188
  %266 = vmatpush.msra.mxu0 %v187
  %267 = vmatpush.msra.mxu0 %v186
  %268 = vmatpush.msra.mxu0 %v185
  %269 = vmatpush.msra.mxu0 %v184
  %270 = vmatpush.msra.mxu0 %v183
  %271 = vmatmul.f32.gmra.mxu0 %v149
  %v272 = vpop.f32.mrf.mxu0
  %v273 = vadd.f32 %v253, %v272
  %274 = vdwg.mxu0
  %275 = vmatpush.msra.mxu0 %v214
  %276 = vmatpush.msra.mxu0 %v213
  %277 = vmatpush.msra.mxu0 %v212
  %278 = vmatpush.msra.mxu0 %v211
  %279 = vmatpush.msra.mxu0 %v210
  %280 = vmatpush.msra.mxu0 %v209
  %281 = vmatpush.msra.mxu0 %v208
  %282 = vmatpush.msra.mxu0 %v207
  %283 = vmatpush.msra.mxu0 %v206
  %284 = vmatpush.msra.mxu0 %v205
  %285 = vmatpush.msra.mxu0 %v204
  %286 = vmatpush.msra.mxu0 %v203
  %287 = vmatpush.msra.mxu0 %v202
  %288 = vmatpush.msra.mxu0 %v201
  %289 = vmatpush.msra.mxu0 %v200
  %290 = vmatpush.msra.mxu0 %v199
  %291 = vmatmul.f32.gmra.mxu0 %v150
  %v292 = vpop.f32.mrf.mxu0
  %v293 = vadd.f32 %v273, %v292
  %294 = vdwg.mxu0
  %v295 = vld [vmem:[%s4] sm:$0x3]
  %v296 = vld [vmem:[%s5] sm:$0x3]
  %298 = vset.pattern.permute.xlu0 0
  %299 = vperm.xlu0 %298, %v296
  %v300 = vpop.permute.xlu0 %299
  %vm302 = vcmask 64512
  %v304 = vsel %vm302, %v295, 0
  %306 = vmatpush.msra.mxu0 0.0
  %307 = vmatpush.msra.mxu0 0.0
  %308 = vmatpush.msra.mxu0 0.0
  %309 = vmatpush.msra.mxu0 0.0
  %310 = vmatpush.msra.mxu0 0.0
  %311 = vmatpush.msra.mxu0 0.0
  %312 = vmatpush.msra.mxu0 0.0
  %313 = vmatpush.msra.mxu0 0.0
  %314 = vmatpush.msra.mxu0 0.0
  %315 = vmatpush.msra.mxu0 0.0
  %316 = vmatpush.msra.mxu0 0.0
  %317 = vmatpush.msra.mxu0 0.0
  %318 = vmatpush.msra.mxu0 0.0
  %319 = vmatpush.msra.mxu0 0.0
  %320 = vmatpush.msra.mxu0 0.0
  %321 = vmatpush.msra.mxu0 %v293
  %322 = vmatmul.f32.gmra.mxu0 %v304
  %v323 = vpop.f32.mrf.mxu0
  %v324 = vadd.f32 %v300, %v323
  %325 = vdwg.mxu0
  %vm326 = vcmask 9216
  %327 = vst.msk [vmem:[%s6] sm:$0x3] %vm326, %v324
  // Predicated region
  $region26: #{classifier_forward.1} parent=0 // pred_check
    _
  $region27: #{classifier_forward.1} parent=0 // pred_check_branch
    %329 = sbr.rel (0) target = $region29
  $region28: #{classifier_forward.1} parent=0 // pred_region
    _
  $region29: #{classifier_forward.1} parent=0 // pred_fallthru
    _
  // Predicated region
  $region30: #{classifier_forward.1} parent=0 // pred_check
    _
  $region31: #{classifier_forward.1} parent=0 // pred_check_branch
    %331 = sbr.rel (0) target = $region33
  $region32: #{classifier_forward.1} parent=0 // pred_region
    _
  $region33: #{classifier_forward.1} parent=0 // pred_fallthru
    _

</llo_original>
